<compile_context>
chip_gen: v7x
topology: tpu7x:2x2x1
jax: 0.10.0
libtpu: 0.0.40
codegen_flags: <defaults>
</compile_context>

<pallas_src>
import math
from functools import partial

import jax
import jax.numpy as jnp
from jax.experimental import pallas as pl
from jax.experimental.pallas import tpu as pltpu

BN_EPS = 1e-5
LANE = 128


# --------------------------------------------------------------------------- #
# Kernel
# --------------------------------------------------------------------------- #
def _mlp_kernel(P, n_x, x_ref, w_ref, v_ref, out_ref):
    """Fused 4-layer MLP on fully VMEM-resident, lane-padded blocks.

    x_ref  : (batch, n_x)  unpadded input activations (f32)
    w_ref  : (4*P, P)      4 stacked (in, out)-layout weight matrices, zero-padded
    v_ref  : (16, P)       rows: b1,g1,be1, b2,g2,be2, b3,g3,be3, b4, pad...
    out_ref: (batch, P)    padded output (real columns are [:n_y])
    """

    def v(r):                          # static slice -> (1, P), free
        return v_ref[r:r + 1, :]

    def linear(h, i, bias_row, k):
        # Cast activations to the weight dtype (f32 or bf16); accumulate in f32.
        lhs = h.astype(w_ref.dtype)
        wmat = w_ref[i * P:i * P + k, :]          # static row slice of the slab
        return jnp.dot(lhs, wmat, preferred_element_type=jnp.float32) + v(bias_row)

    def batchnorm(h, gamma_row, beta_row):
        # Training-mode BatchNorm1d: batch mean, biased batch variance (f32 stats).
        mu = jnp.mean(h, axis=0, keepdims=True)
        d = h - mu
        var = jnp.mean(d * d, axis=0, keepdims=True)
        inv = jax.lax.rsqrt(var + BN_EPS)
        return d * inv * v(gamma_row) + v(beta_row)

    h = x_ref[...]
    h = jnp.maximum(linear(h, 0, 0, n_x), 0.0)    # contract only the real n_x rows
    h = batchnorm(h, 1, 2)
    h = jnp.maximum(linear(h, 1, 3, P), 0.0)
    h = batchnorm(h, 4, 5)
    h = jnp.maximum(linear(h, 2, 6, P), 0.0)
    h = batchnorm(h, 7, 8)
    out_ref[...] = linear(h, 3, 9, P).astype(out_ref.dtype)


# --------------------------------------------------------------------------- #
# One-time parameter packing (hoisted out of the forward path)
# --------------------------------------------------------------------------- #
def _pad2(a, rows, cols, fill=0.0):
    out = jnp.full((rows, cols), fill, a.dtype)
    return out.at[: a.shape[0], : a.shape[1]].set(a)


def _pad_row(vec, cols, fill=0.0):
    r = jnp.full((1, cols), fill, jnp.float32)
    return r.at[0, : vec.shape[0]].set(vec.astype(jnp.float32))


def prepack_params(params, *, mxu_bf16=False):
    """Pack the 14 parameter tensors into two lane-dense slabs, ONCE.

    mxu_bf16=True pre-casts the weight slab to bf16 (f32 accumulation kept in
    the kernel) -- only worthwhile on v6e/v7x at larger batch.
    """
    n_x = params["w1"].shape[1]
    n_h1 = params["w1"].shape[0]
    n_h2 = params["w2"].shape[0]
    n_h3 = params["w3"].shape[0]
    n_y = params["w4"].shape[0]

    # Single padded lane width for every feature dim (128-lane multiple).
    P = LANE * pl.cdiv(max(n_x, n_h1, n_h2, n_h3, n_y), LANE)

    # Weight slab: (4*P, P); each layer's weight pre-transposed to (in, out)
    # and zero-padded so padded columns/rows contribute exactly 0.
    w_dtype = jnp.bfloat16 if mxu_bf16 else jnp.float32
    w_slab = jnp.concatenate(
        [_pad2(params[f"w{i}"].T.astype(jnp.float32), P, P) for i in (1, 2, 3, 4)],
        axis=0,
    ).astype(w_dtype)

    # Vector slab: (16, P).  Row order must match _mlp_kernel.
    # Biases / betas zero-padded, gammas one-padded (padded cols stay 0 anyway).
    v_rows = [
        _pad_row(params["b1"], P), _pad_row(params["g1"], P, 1.0), _pad_row(params["be1"], P),
        _pad_row(params["b2"], P), _pad_row(params["g2"], P, 1.0), _pad_row(params["be2"], P),
        _pad_row(params["b3"], P), _pad_row(params["g3"], P, 1.0), _pad_row(params["be3"], P),
        _pad_row(params["b4"], P),
    ]
    v_rows += [jnp.zeros((1, P), jnp.float32)] * (16 - len(v_rows))
    v_slab = jnp.concatenate(v_rows, axis=0)

    return {
        "w_slab": jax.block_until_ready(w_slab),
        "v_slab": jax.block_until_ready(v_slab),
        "P": int(P),
        "dims": (n_x, n_h1, n_h2, n_h3, n_y),
    }


# --------------------------------------------------------------------------- #
# Forward factory: per-call path is just pallas_call + column slice
# --------------------------------------------------------------------------- #
def make_forward(packed):
    P = packed["P"]
    n_x, n_h1, n_h2, n_h3, n_y = packed["dims"]
    w_slab = packed["w_slab"]
    v_slab = packed["v_slab"]

    vmem = pl.BlockSpec(memory_space=pltpu.MemorySpace.VMEM)
    kernel = partial(_mlp_kernel, P, n_x)

    @jax.jit
    def _forward(x, w_slab, v_slab):
        batch = x.shape[0]
        flops = 2 * batch * (n_x * n_h1 + n_h1 * n_h2 + n_h2 * n_h3 + n_h3 * n_y)
        bytes_accessed = int(
            4 * (batch * n_x + v_slab.size + batch * P)
            + w_slab.size * w_slab.dtype.itemsize
        )
        ce = pl.CostEstimate(flops=int(flops), transcendentals=0,
                             bytes_accessed=bytes_accessed)

        out_pad = pl.pallas_call(
            kernel,
            out_shape=jax.ShapeDtypeStruct((batch, P), jnp.float32),
            in_specs=[vmem, vmem, vmem],
            out_specs=vmem,
            cost_estimate=ce,
        )(x.astype(jnp.float32), w_slab, v_slab)

        # Drop the padded output columns (plain XLA slice outside the kernel).
        return out_pad[:, :n_y]

    return lambda x: _forward(x, w_slab, v_slab)


# --------------------------------------------------------------------------- #
# Init + pure-JAX reference
# --------------------------------------------------------------------------- #
def init_params(key, n_x, n_h1, n_h2, n_h3, n_y):
    """Deterministic init mimicking PyTorch nn.Linear default (uniform +-1/sqrt(fan_in)).
    BatchNorm affine params start at gamma=1, beta=0 (PyTorch default)."""
    dims = [(n_h1, n_x), (n_h2, n_h1), (n_h3, n_h2), (n_y, n_h3)]
    params = {}
    for i, (fan_out, fan_in) in enumerate(dims, start=1):
        key, kw, kb = jax.random.split(key, 3)
        bound = 1.0 / math.sqrt(fan_in)
        params[f"w{i}"] = jax.random.uniform(
            kw, (fan_out, fan_in), jnp.float32, minval=-bound, maxval=bound)
        params[f"b{i}"] = jax.random.uniform(
            kb, (fan_out,), jnp.float32, minval=-bound, maxval=bound)
    for i, n in zip((1, 2, 3), (n_h1, n_h2, n_h3)):
        params[f"g{i}"] = jnp.ones((n,), jnp.float32)
        params[f"be{i}"] = jnp.zeros((n,), jnp.float32)
    return params


def _reference_forward(x, p):
    def bn(h, g, be):
        mu = jnp.mean(h, axis=0, keepdims=True)
        var = jnp.mean((h - mu) ** 2, axis=0, keepdims=True)
        return (h - mu) * jax.lax.rsqrt(var + BN_EPS) * g + be

    h = jnp.maximum(x @ p["w1"].T + p["b1"], 0.0)
    h = bn(h, p["g1"], p["be1"])
    h = jnp.maximum(h @ p["w2"].T + p["b2"], 0.0)
    h = bn(h, p["g2"], p["be2"])
    h = jnp.maximum(h @ p["w3"].T + p["b3"], 0.0)
    h = bn(h, p["g3"], p["be3"])
    return h @ p["w4"].T + p["b4"]


# --------------------------------------------------------------------------- #
if __name__ == "__main__":
    n_x, n_h1, n_h2, n_h3, n_y = 32, 64, 64, 32, 16
    batch = 128            # >= 128 rows so the MXU sees a full tile per dot
    MXU_BF16 = False       # flip True on v6e/v7x at batch >= ~256

    key = jax.random.PRNGKey(0)
    key, kx = jax.random.split(key)
    x = jax.random.normal(kx, (batch, n_x), jnp.float32)
    params = init_params(key, n_x, n_h1, n_h2, n_h3, n_y)

    # One-time packing (NOT on the per-forward path).
    packed = prepack_params(params, mxu_bf16=MXU_BF16)
    forward = make_forward(packed)

    out = jax.block_until_ready(forward(x))
    assert out.shape == (batch, n_y)

    ref = _reference_forward(x, params)
    if MXU_BF16:
        tol = dict(atol=2e-2, rtol=2e-2)   # bf16 mantissa ~3 decimal digits
    else:
        tol = dict(atol=2e-4, rtol=2e-4)
    assert jnp.allclose(out, ref, **tol)

    print("KERNEL_OK")
</pallas_src>

<mosaic_0001>
module attributes {stable_mosaic.version = 11 : i64} {
  func.func @_mlp_kernel(%arg0: memref<128x32xf32, #tpu.memory_space<vmem>>, %arg1: memref<512x128xf32, #tpu.memory_space<vmem>>, %arg2: memref<16x128xf32, #tpu.memory_space<vmem>>, %arg3: memref<128x128xf32, #tpu.memory_space<vmem>>) attributes {dimension_semantics = [], scalar_prefetch = 0 : i64, scratch_operands = 0 : i64, tpu.core_type = #tpu.core_type<tc>} {
    %c0 = arith.constant 0 : index
    %c0_0 = arith.constant 0 : index
    %0 = vector.load %arg0[%c0, %c0_0] : memref<128x32xf32, #tpu.memory_space<vmem>>, vector<128x32xf32>
    %c0_1 = arith.constant 0 : index
    %c0_2 = arith.constant 0 : index
    %1 = vector.load %arg1[%c0_1, %c0_2] : memref<512x128xf32, #tpu.memory_space<vmem>>, vector<32x128xf32>
    %cst = arith.constant dense<0.000000e+00> : vector<128x128xf32>
    %2 = tpu.matmul %0, %1, %cst {dimension_numbers = #tpu.dot_dimension_numbers<[1], [0], [0], [1], [0, 0, 1, 1], [], []>} : vector<128x32xf32>, vector<32x128xf32>, vector<128x128xf32> -> vector<128x128xf32>
    %c0_3 = arith.constant 0 : index
    %c0_4 = arith.constant 0 : index
    %3 = vector.load %arg2[%c0_3, %c0_4] : memref<16x128xf32, #tpu.memory_space<vmem>>, vector<1x128xf32>
    %4 = vector.broadcast %3 : vector<1x128xf32> to vector<128x128xf32>
    %5 = arith.addf %2, %4 : vector<128x128xf32>
    %cst_5 = arith.constant 0.000000e+00 : f32
    %6 = vector.broadcast %cst_5 : f32 to vector<128x128xf32>
    %7 = arith.maximumf %5, %6 : vector<128x128xf32>
    %cst_6 = arith.constant dense<0.000000e+00> : vector<128xf32>
    %8 = vector.multi_reduction <add>, %7, %cst_6 [0] : vector<128x128xf32> to vector<128xf32>
    %9 = vector.shape_cast %8 : vector<128xf32> to vector<1x128xf32>
    %cst_7 = arith.constant 1.280000e+02 : f32
    %10 = vector.broadcast %cst_7 : f32 to vector<1x128xf32>
    %11 = arith.divf %9, %10 : vector<1x128xf32>
    %12 = vector.broadcast %11 : vector<1x128xf32> to vector<128x128xf32>
    %13 = arith.subf %7, %12 : vector<128x128xf32>
    %14 = arith.mulf %13, %13 : vector<128x128xf32>
    %cst_8 = arith.constant dense<0.000000e+00> : vector<128xf32>
    %15 = vector.multi_reduction <add>, %14, %cst_8 [0] : vector<128x128xf32> to vector<128xf32>
    %16 = vector.shape_cast %15 : vector<128xf32> to vector<1x128xf32>
    %cst_9 = arith.constant 1.280000e+02 : f32
    %17 = vector.broadcast %cst_9 : f32 to vector<1x128xf32>
    %18 = arith.divf %16, %17 : vector<1x128xf32>
    %cst_10 = arith.constant 9.99999974E-6 : f32
    %19 = vector.broadcast %cst_10 : f32 to vector<1x128xf32>
    %20 = arith.addf %18, %19 : vector<1x128xf32>
    %21 = math.rsqrt %20 : vector<1x128xf32>
    %22 = vector.broadcast %21 : vector<1x128xf32> to vector<128x128xf32>
    %23 = arith.mulf %13, %22 : vector<128x128xf32>
    %c1 = arith.constant 1 : index
    %c0_11 = arith.constant 0 : index
    %24 = vector.load %arg2[%c1, %c0_11] : memref<16x128xf32, #tpu.memory_space<vmem>>, vector<1x128xf32>
    %25 = vector.broadcast %24 : vector<1x128xf32> to vector<128x128xf32>
    %26 = arith.mulf %23, %25 : vector<128x128xf32>
    %c2 = arith.constant 2 : index
    %c0_12 = arith.constant 0 : index
    %27 = vector.load %arg2[%c2, %c0_12] : memref<16x128xf32, #tpu.memory_space<vmem>>, vector<1x128xf32>
    %28 = vector.broadcast %27 : vector<1x128xf32> to vector<128x128xf32>
    %29 = arith.addf %26, %28 : vector<128x128xf32>
    %c128 = arith.constant 128 : index
    %c0_13 = arith.constant 0 : index
    %30 = vector.load %arg1[%c128, %c0_13] : memref<512x128xf32, #tpu.memory_space<vmem>>, vector<128x128xf32>
    %cst_14 = arith.constant dense<0.000000e+00> : vector<128x128xf32>
    %31 = tpu.matmul %29, %30, %cst_14 {dimension_numbers = #tpu.dot_dimension_numbers<[1], [0], [0], [1], [0, 0, 1, 1], [], []>} : vector<128x128xf32>, vector<128x128xf32>, vector<128x128xf32> -> vector<128x128xf32>
    %c3 = arith.constant 3 : index
    %c0_15 = arith.constant 0 : index
    %32 = vector.load %arg2[%c3, %c0_15] : memref<16x128xf32, #tpu.memory_space<vmem>>, vector<1x128xf32>
    %33 = vector.broadcast %32 : vector<1x128xf32> to vector<128x128xf32>
    %34 = arith.addf %31, %33 : vector<128x128xf32>
    %cst_16 = arith.constant 0.000000e+00 : f32
    %35 = vector.broadcast %cst_16 : f32 to vector<128x128xf32>
    %36 = arith.maximumf %34, %35 : vector<128x128xf32>
    %cst_17 = arith.constant dense<0.000000e+00> : vector<128xf32>
    %37 = vector.multi_reduction <add>, %36, %cst_17 [0] : vector<128x128xf32> to vector<128xf32>
    %38 = vector.shape_cast %37 : vector<128xf32> to vector<1x128xf32>
    %cst_18 = arith.constant 1.280000e+02 : f32
    %39 = vector.broadcast %cst_18 : f32 to vector<1x128xf32>
    %40 = arith.divf %38, %39 : vector<1x128xf32>
    %41 = vector.broadcast %40 : vector<1x128xf32> to vector<128x128xf32>
    %42 = arith.subf %36, %41 : vector<128x128xf32>
    %43 = arith.mulf %42, %42 : vector<128x128xf32>
    %cst_19 = arith.constant dense<0.000000e+00> : vector<128xf32>
    %44 = vector.multi_reduction <add>, %43, %cst_19 [0] : vector<128x128xf32> to vector<128xf32>
    %45 = vector.shape_cast %44 : vector<128xf32> to vector<1x128xf32>
    %cst_20 = arith.constant 1.280000e+02 : f32
    %46 = vector.broadcast %cst_20 : f32 to vector<1x128xf32>
    %47 = arith.divf %45, %46 : vector<1x128xf32>
    %cst_21 = arith.constant 9.99999974E-6 : f32
    %48 = vector.broadcast %cst_21 : f32 to vector<1x128xf32>
    %49 = arith.addf %47, %48 : vector<1x128xf32>
    %50 = math.rsqrt %49 : vector<1x128xf32>
    %51 = vector.broadcast %50 : vector<1x128xf32> to vector<128x128xf32>
    %52 = arith.mulf %42, %51 : vector<128x128xf32>
    %c4 = arith.constant 4 : index
    %c0_22 = arith.constant 0 : index
    %53 = vector.load %arg2[%c4, %c0_22] : memref<16x128xf32, #tpu.memory_space<vmem>>, vector<1x128xf32>
    %54 = vector.broadcast %53 : vector<1x128xf32> to vector<128x128xf32>
    %55 = arith.mulf %52, %54 : vector<128x128xf32>
    %c5 = arith.constant 5 : index
    %c0_23 = arith.constant 0 : index
    %56 = vector.load %arg2[%c5, %c0_23] : memref<16x128xf32, #tpu.memory_space<vmem>>, vector<1x128xf32>
    %57 = vector.broadcast %56 : vector<1x128xf32> to vector<128x128xf32>
    %58 = arith.addf %55, %57 : vector<128x128xf32>
    %c256 = arith.constant 256 : index
    %c0_24 = arith.constant 0 : index
    %59 = vector.load %arg1[%c256, %c0_24] : memref<512x128xf32, #tpu.memory_space<vmem>>, vector<128x128xf32>
    %cst_25 = arith.constant dense<0.000000e+00> : vector<128x128xf32>
    %60 = tpu.matmul %58, %59, %cst_25 {dimension_numbers = #tpu.dot_dimension_numbers<[1], [0], [0], [1], [0, 0, 1, 1], [], []>} : vector<128x128xf32>, vector<128x128xf32>, vector<128x128xf32> -> vector<128x128xf32>
    %c6 = arith.constant 6 : index
    %c0_26 = arith.constant 0 : index
    %61 = vector.load %arg2[%c6, %c0_26] : memref<16x128xf32, #tpu.memory_space<vmem>>, vector<1x128xf32>
    %62 = vector.broadcast %61 : vector<1x128xf32> to vector<128x128xf32>
    %63 = arith.addf %60, %62 : vector<128x128xf32>
    %cst_27 = arith.constant 0.000000e+00 : f32
    %64 = vector.broadcast %cst_27 : f32 to vector<128x128xf32>
    %65 = arith.maximumf %63, %64 : vector<128x128xf32>
    %cst_28 = arith.constant dense<0.000000e+00> : vector<128xf32>
    %66 = vector.multi_reduction <add>, %65, %cst_28 [0] : vector<128x128xf32> to vector<128xf32>
    %67 = vector.shape_cast %66 : vector<128xf32> to vector<1x128xf32>
    %cst_29 = arith.constant 1.280000e+02 : f32
    %68 = vector.broadcast %cst_29 : f32 to vector<1x128xf32>
    %69 = arith.divf %67, %68 : vector<1x128xf32>
    %70 = vector.broadcast %69 : vector<1x128xf32> to vector<128x128xf32>
    %71 = arith.subf %65, %70 : vector<128x128xf32>
    %72 = arith.mulf %71, %71 : vector<128x128xf32>
    %cst_30 = arith.constant dense<0.000000e+00> : vector<128xf32>
    %73 = vector.multi_reduction <add>, %72, %cst_30 [0] : vector<128x128xf32> to vector<128xf32>
    %74 = vector.shape_cast %73 : vector<128xf32> to vector<1x128xf32>
    %cst_31 = arith.constant 1.280000e+02 : f32
    %75 = vector.broadcast %cst_31 : f32 to vector<1x128xf32>
    %76 = arith.divf %74, %75 : vector<1x128xf32>
    %cst_32 = arith.constant 9.99999974E-6 : f32
    %77 = vector.broadcast %cst_32 : f32 to vector<1x128xf32>
    %78 = arith.addf %76, %77 : vector<1x128xf32>
    %79 = math.rsqrt %78 : vector<1x128xf32>
    %80 = vector.broadcast %79 : vector<1x128xf32> to vector<128x128xf32>
    %81 = arith.mulf %71, %80 : vector<128x128xf32>
    %c7 = arith.constant 7 : index
    %c0_33 = arith.constant 0 : index
    %82 = vector.load %arg2[%c7, %c0_33] : memref<16x128xf32, #tpu.memory_space<vmem>>, vector<1x128xf32>
    %83 = vector.broadcast %82 : vector<1x128xf32> to vector<128x128xf32>
    %84 = arith.mulf %81, %83 : vector<128x128xf32>
    %c8 = arith.constant 8 : index
    %c0_34 = arith.constant 0 : index
    %85 = vector.load %arg2[%c8, %c0_34] : memref<16x128xf32, #tpu.memory_space<vmem>>, vector<1x128xf32>
    %86 = vector.broadcast %85 : vector<1x128xf32> to vector<128x128xf32>
    %87 = arith.addf %84, %86 : vector<128x128xf32>
    %c384 = arith.constant 384 : index
    %c0_35 = arith.constant 0 : index
    %88 = vector.load %arg1[%c384, %c0_35] : memref<512x128xf32, #tpu.memory_space<vmem>>, vector<128x128xf32>
    %cst_36 = arith.constant dense<0.000000e+00> : vector<128x128xf32>
    %89 = tpu.matmul %87, %88, %cst_36 {dimension_numbers = #tpu.dot_dimension_numbers<[1], [0], [0], [1], [0, 0, 1, 1], [], []>} : vector<128x128xf32>, vector<128x128xf32>, vector<128x128xf32> -> vector<128x128xf32>
    %c9 = arith.constant 9 : index
    %c0_37 = arith.constant 0 : index
    %90 = vector.load %arg2[%c9, %c0_37] : memref<16x128xf32, #tpu.memory_space<vmem>>, vector<1x128xf32>
    %91 = vector.broadcast %90 : vector<1x128xf32> to vector<128x128xf32>
    %92 = arith.addf %89, %91 : vector<128x128xf32>
    %c0_38 = arith.constant 0 : index
    %c0_39 = arith.constant 0 : index
    %93 = vector.load %arg3[%c0_38, %c0_39] : memref<128x128xf32, #tpu.memory_space<vmem>>, vector<128x128xf32>
    tpu.vector_store %arg3[%c0_38, %c0_39], %92 {strides = array<i32>} : memref<128x128xf32, #tpu.memory_space<vmem>>, vector<128x128xf32>,
    return
  }
}

</mosaic_0001>

<llo_original>
// kernel: _forward.1
$region0: #{_forward.1}
  #allocation0 [shape = 'u32[]', space=smem, size = 0x4, offset = 0x4, fixed_abs, tag = 'smem constant byte address 0x4 - core index']
  #allocation1 [shape = 'u32[144,128]{1,0:T(1,128)}', space=vmem, size = 0x12000, scoped, tag = 'internal scratch']
  %s0 = inlined_call_operand.vmem [shape: f32[128,32], index: 0, kind: input, shape index: {}]
  %s1 = inlined_call_operand.hbm [shape: f32[512,128], index: 1, kind: input, shape index: {}]
  %s2 = inlined_call_operand.vmem [shape: f32[16,128], index: 2, kind: input, shape index: {}]
  %s3 = inlined_call_operand.vmem [shape: f32[128,128], index: 3, kind: output, shape index: {}]
  %s4 = sld [smem:[#allocation0]]
  $region26: #{_forward.1} parent=0
    _
  %s6 = ssub.s32 1, %s4
  %s7 = scalar_select 0, %s6, %s4
  $region1: #{_forward.1} parent=0
    #allocation2 [shape = 'u8[262144]{0}', space=vmem, size = 0x40000, scoped, tag = 'input window, operand 1, single buffered']
    #allocation3 [shape = 's32[1]{0}', space=sflag, size = 0x4, scoped, tag = 'scoped memory for _forward.1']
    %8 = vsyncpa [#allocation3], 0
    // Predicated region
    $region2: #{_forward.1} parent=1 // pred_check
      _
    $region3: #{_forward.1} parent=1 // pred_check_branch
      %10 = sbr.rel (0) target = $region5
    $region4: #{_forward.1} parent=1 // pred_region
      _
    $region5: #{_forward.1} parent=1 // pred_fallthru
      _
    // Predicated region
    $region6: #{_forward.1} parent=1 // pred_check
      _
    $region7: #{_forward.1} parent=1 // pred_check_branch
      %12 = sbr.rel (0) target = $region9
    $region8: #{_forward.1} parent=1 // pred_region
      %s14 = ssub.s32 8192, 8192
      %15 = vsyncadd [#allocation3], %s14
      %s16 = sshll.u32 [#allocation2], 4
      %s17 = int_to_ptr.vmem [resolvable:$true] %s16
      %22 = dma.hbm_to_vmem [thread:$0]  %s1, 8192, %s17, [#allocation3], 128, 128, 8
    $region9: #{_forward.1} parent=1 // pred_fallthru
      _
    // Predicated region
    $region10: #{_forward.1} parent=1 // pred_check
      _
    $region11: #{_forward.1} parent=1 // pred_check_branch
      %24 = sbr.rel (0) target = $region13
    $region12: #{_forward.1} parent=1 // pred_region
      _
    $region13: #{_forward.1} parent=1 // pred_fallthru
      _
    // Predicated region
    $region14: #{_forward.1} parent=1 // pred_check
      _
    $region15: #{_forward.1} parent=1 // pred_check_branch
      %26 = sbr.rel (0) target = $region17
    $region16: #{_forward.1} parent=1 // pred_region
      %27 = dma.done [#allocation3], 8192
    $region17: #{_forward.1} parent=1 // pred_fallthru
      _
    %v28 = vld [vmem:[%s0] sm:$0xff]
    %v29 = vld [vmem:[%s0 + $0x8] sm:$0xff]
    %v30 = vld [vmem:[%s0 + $0x10] sm:$0xff]
    %v31 = vld [vmem:[%s0 + $0x18] sm:$0xff]
    %v32 = vld [vmem:[%s0 + $0x20] sm:$0xff]
    %v33 = vld [vmem:[%s0 + $0x28] sm:$0xff]
    %v34 = vld [vmem:[%s0 + $0x30] sm:$0xff]
    %v35 = vld [vmem:[%s0 + $0x38] sm:$0xff]
    %v36 = vld [vmem:[%s0 + $0x40] sm:$0xff]
    %v37 = vld [vmem:[%s0 + $0x48] sm:$0xff]
    %v38 = vld [vmem:[%s0 + $0x50] sm:$0xff]
    %v39 = vld [vmem:[%s0 + $0x58] sm:$0xff]
    %v40 = vld [vmem:[%s0 + $0x60] sm:$0xff]
    %v41 = vld [vmem:[%s0 + $0x68] sm:$0xff]
    %v42 = vld [vmem:[%s0 + $0x70] sm:$0xff]
    %v43 = vld [vmem:[%s0 + $0x78] sm:$0xff]
    %v44 = vld [vmem:[#allocation2] sm:$0xff]
    %v45 = vld [vmem:[#allocation2 + $0x8] sm:$0xff]
    %v46 = vld [vmem:[#allocation2 + $0x10] sm:$0xff]
    %v47 = vld [vmem:[#allocation2 + $0x18] sm:$0xff]
    %v48 = vld [vmem:[%s2] sm:$0x1]
    %v49 = vlaneseq
    %v50 = vshrl.u32 %v49, 7
    %v51 = vsub.s32 0, %v50
    %v52 = vrot.slane %v48, %v51
    %vm53 = vcmask 261120
    %v55 = vsel %vm53, %v28, 0
    %v58 = vsel %vm53, %v29, 0
    %v61 = vsel %vm53, %v30, 0
    %v64 = vsel %vm53, %v31, 0
    %v67 = vsel %vm53, %v32, 0
    %v70 = vsel %vm53, %v33, 0
    %v73 = vsel %vm53, %v34, 0
    %v76 = vsel %vm53, %v35, 0
    %v79 = vsel %vm53, %v36, 0
    %v82 = vsel %vm53, %v37, 0
    %v85 = vsel %vm53, %v38, 0
    %v88 = vsel %vm53, %v39, 0
    %v91 = vsel %vm53, %v40, 0
    %v94 = vsel %vm53, %v41, 0
    %v97 = vsel %vm53, %v42, 0
    %v100 = vsel %vm53, %v43, 0
    %102 = vmatprep.subr.mxu0 0.0
    %103 = vmatpush1.msra.mxu0 %v44
    %104 = vmatprep.subr.mxu0 0.0
    %105 = vmatpush1.msra.mxu0 %v45
    %106 = vmatprep.subr.mxu0 0.0
    %107 = vmatpush1.msra.mxu0 %v46
    %108 = vmatprep.subr.mxu0 0.0
    %109 = vmatpush1.msra.mxu0 %v47
    %110 = vmatprep.subr.mxu0 0.0
    %111 = vmatpush1.msra.mxu0 0.0
    %112 = vmatprep.subr.mxu0 0.0
    %113 = vmatpush1.msra.mxu0 0.0
    %114 = vmatprep.subr.mxu0 0.0
    %115 = vmatpush1.msra.mxu0 0.0
    %116 = vmatprep.subr.mxu0 0.0
    %117 = vmatpush1.msra.mxu0 0.0
    %118 = vmatprep.subr.mxu0 0.0
    %119 = vmatpush1.msra.mxu0 0.0
    %120 = vmatprep.subr.mxu0 0.0
    %121 = vmatpush1.msra.mxu0 0.0
    %122 = vmatprep.subr.mxu0 0.0
    %123 = vmatpush1.msra.mxu0 0.0
    %124 = vmatprep.subr.mxu0 0.0
    %125 = vmatpush1.msra.mxu0 0.0
    %126 = vmatprep.subr.mxu0 0.0
    %127 = vmatpush1.msra.mxu0 0.0
    %128 = vmatprep.subr.mxu0 0.0
    %129 = vmatpush1.msra.mxu0 0.0
    %130 = vmatprep.subr.mxu0 0.0
    %131 = vmatpush1.msra.mxu0 0.0
    %132 = vmatprep.subr.mxu0 0.0
    %133 = vmatpush1.msra.mxu0 0.0
    %134 = vmatprep.subr.mxu0 0.0
    %135 = vmatpush1.msra.mxu0 0.0
    %136 = vmatprep.subr.mxu0 0.0
    %137 = vmatpush1.msra.mxu0 0.0
    %138 = vmatprep.subr.mxu0 0.0
    %139 = vmatpush1.msra.mxu0 0.0
    %140 = vmatprep.subr.mxu0 0.0
    %141 = vmatpush1.msra.mxu0 0.0
    %142 = vmatprep.subr.mxu0 0.0
    %143 = vmatpush1.msra.mxu0 0.0
    %144 = vmatprep.subr.mxu0 0.0
    %145 = vmatpush1.msra.mxu0 0.0
    %146 = vmatprep.subr.mxu0 0.0
    %147 = vmatpush1.msra.mxu0 0.0
    %148 = vmatprep.subr.mxu0 0.0
    %149 = vmatpush1.msra.mxu0 0.0
    %150 = vmatprep.subr.mxu0 0.0
    %151 = vmatpush1.msra.mxu0 0.0
    %152 = vmatprep.subr.mxu0 0.0
    %153 = vmatpush1.msra.mxu0 0.0
    %154 = vmatprep.subr.mxu0 0.0
    %155 = vmatpush1.msra.mxu0 0.0
    %156 = vmatprep.subr.mxu0 0.0
    %157 = vmatpush1.msra.mxu0 0.0
    %158 = vmatprep.subr.mxu0 0.0
    %159 = vmatpush1.msra.mxu0 0.0
    %160 = vmatprep.subr.mxu0 0.0
    %161 = vmatpush1.msra.mxu0 0.0
    %162 = vmatprep.subr.mxu0 0.0
    %163 = vmatpush1.msra.mxu0 0.0
    %164 = vmatprep.subr.mxu0 0.0
    %165 = vmatpush1.msra.mxu0 0.0
    %166 = vmatprep.mubr.f32.mxu0 0.0
    %167 = vmatmul.mubr.f32.gmra.mrb[0].mxu0 %v55
    %v168 = vpop.f32.mrb[0].mxu0
    %v169 = vadd.f32 %v52, %v168
    %v170 = vpop.f32.mrb[0].mxu0
    %171 = vmatprep.mubr.f32.mxu0 0.0
    %172 = vmatmul.mubr.f32.gmra.mrb[0].mxu0 %v58
    %v173 = vpop.f32.mrb[0].mxu0
    %v174 = vadd.f32 %v52, %v173
    %v175 = vpop.f32.mrb[0].mxu0
    %176 = vmatprep.mubr.f32.mxu0 0.0
    %177 = vmatmul.mubr.f32.gmra.mrb[0].mxu0 %v61
    %v178 = vpop.f32.mrb[0].mxu0
    %v179 = vadd.f32 %v52, %v178
    %v180 = vpop.f32.mrb[0].mxu0
    %181 = vmatprep.mubr.f32.mxu0 0.0
    %182 = vmatmul.mubr.f32.gmra.mrb[0].mxu0 %v64
    %v183 = vpop.f32.mrb[0].mxu0
    %v184 = vadd.f32 %v52, %v183
    %v185 = vpop.f32.mrb[0].mxu0
    %186 = vmatprep.mubr.f32.mxu0 0.0
    %187 = vmatmul.mubr.f32.gmra.mrb[0].mxu0 %v67
    %v188 = vpop.f32.mrb[0].mxu0
    %v189 = vadd.f32 %v52, %v188
    %v190 = vpop.f32.mrb[0].mxu0
    %191 = vmatprep.mubr.f32.mxu0 0.0
    %192 = vmatmul.mubr.f32.gmra.mrb[0].mxu0 %v70
    %v193 = vpop.f32.mrb[0].mxu0
    %v194 = vadd.f32 %v52, %v193
    %v195 = vpop.f32.mrb[0].mxu0
    %196 = vmatprep.mubr.f32.mxu0 0.0
    %197 = vmatmul.mubr.f32.gmra.mrb[0].mxu0 %v73
    %v198 = vpop.f32.mrb[0].mxu0
    %v199 = vadd.f32 %v52, %v198
    %v200 = vpop.f32.mrb[0].mxu0
    %201 = vmatprep.mubr.f32.mxu0 0.0
    %202 = vmatmul.mubr.f32.gmra.mrb[0].mxu0 %v76
    %v203 = vpop.f32.mrb[0].mxu0
    %v204 = vadd.f32 %v52, %v203
    %v205 = vpop.f32.mrb[0].mxu0
    %206 = vmatprep.mubr.f32.mxu0 0.0
    %207 = vmatmul.mubr.f32.gmra.mrb[0].mxu0 %v79
    %v208 = vpop.f32.mrb[0].mxu0
    %v209 = vadd.f32 %v52, %v208
    %v210 = vpop.f32.mrb[0].mxu0
    %211 = vmatprep.mubr.f32.mxu0 0.0
    %212 = vmatmul.mubr.f32.gmra.mrb[0].mxu0 %v82
    %v213 = vpop.f32.mrb[0].mxu0
    %v214 = vadd.f32 %v52, %v213
    %v215 = vpop.f32.mrb[0].mxu0
    %216 = vmatprep.mubr.f32.mxu0 0.0
    %217 = vmatmul.mubr.f32.gmra.mrb[0].mxu0 %v85
    %v218 = vpop.f32.mrb[0].mxu0
    %v219 = vadd.f32 %v52, %v218
    %v220 = vpop.f32.mrb[0].mxu0
    %221 = vmatprep.mubr.f32.mxu0 0.0
    %222 = vmatmul.mubr.f32.gmra.mrb[0].mxu0 %v88
    %v223 = vpop.f32.mrb[0].mxu0
    %v224 = vadd.f32 %v52, %v223
    %v225 = vpop.f32.mrb[0].mxu0
    %226 = vmatprep.mubr.f32.mxu0 0.0
    %227 = vmatmul.mubr.f32.gmra.mrb[0].mxu0 %v91
    %v228 = vpop.f32.mrb[0].mxu0
    %v229 = vadd.f32 %v52, %v228
    %v230 = vpop.f32.mrb[0].mxu0
    %231 = vmatprep.mubr.f32.mxu0 0.0
    %232 = vmatmul.mubr.f32.gmra.mrb[0].mxu0 %v94
    %v233 = vpop.f32.mrb[0].mxu0
    %v234 = vadd.f32 %v52, %v233
    %v235 = vpop.f32.mrb[0].mxu0
    %236 = vmatprep.mubr.f32.mxu0 0.0
    %237 = vmatmul.mubr.f32.gmra.mrb[0].mxu0 %v97
    %v238 = vpop.f32.mrb[0].mxu0
    %v239 = vadd.f32 %v52, %v238
    %v240 = vpop.f32.mrb[0].mxu0
    %241 = vmatprep.mubr.f32.mxu0 0.0
    %242 = vmatmul.mubr.f32.gmra.mrb[0].mxu0 %v100
    %v243 = vpop.f32.mrb[0].mxu0
    %v244 = vadd.f32 %v52, %v243
    %v245 = vpop.f32.mrb[0].mxu0
    %246 = vdwg.mxu0
    %v247 = vmax.f32 %v169, 0.0
    %v248 = vmax.f32 %v174, 0.0
    %v249 = vmax.f32 %v179, 0.0
    %v250 = vmax.f32 %v184, 0.0
    %v251 = vmax.f32 %v189, 0.0
    %v252 = vmax.f32 %v194, 0.0
    %v253 = vmax.f32 %v199, 0.0
    %v254 = vmax.f32 %v204, 0.0
    %v255 = vmax.f32 %v209, 0.0
    %v256 = vmax.f32 %v214, 0.0
    %v257 = vmax.f32 %v219, 0.0
    %v258 = vmax.f32 %v224, 0.0
    %v259 = vmax.f32 %v229, 0.0
    %v260 = vmax.f32 %v234, 0.0
    %v261 = vmax.f32 %v239, 0.0
    %v262 = vmax.f32 %v244, 0.0
    %v263 = vadd.f32 %v247, %v248
    %v264 = vadd.f32 %v263, %v249
    %v265 = vadd.f32 %v264, %v250
    %v266 = vadd.f32 %v265, %v251
    %v267 = vadd.f32 %v266, %v252
    %v268 = vadd.f32 %v267, %v253
    %v269 = vadd.f32 %v268, %v254
    %v270 = vadd.f32 %v269, %v255
    %v271 = vadd.f32 %v270, %v256
    %v272 = vadd.f32 %v271, %v257
    %v273 = vadd.f32 %v272, %v258
    %v274 = vadd.f32 %v273, %v259
    %v275 = vadd.f32 %v274, %v260
    %v276 = vadd.f32 %v275, %v261
    %v277 = vadd.f32 %v276, %v262
    %v278 = vrot.slane %v277, 4
    %v279 = vadd.f32 %v277, %v278
    %v280 = vrot.slane %v279, 2
    %v281 = vadd.f32 %v279, %v280
    %v282 = vrot.slane %v281, 1
    %v283 = vadd.f32 %v281, %v282
    %v284 = vrcp.pop 128.0
    %v285 = vmul.f32 %v283, %v284
    %v286 = vsub.f32 %v247, %v285
    %v287 = vsub.f32 %v248, %v285
    %v288 = vsub.f32 %v249, %v285
    %v289 = vsub.f32 %v250, %v285
    %v290 = vsub.f32 %v251, %v285
    %v291 = vsub.f32 %v252, %v285
    %v292 = vsub.f32 %v253, %v285
    %v293 = vsub.f32 %v254, %v285
    %v294 = vsub.f32 %v255, %v285
    %v295 = vsub.f32 %v256, %v285
    %v296 = vsub.f32 %v257, %v285
    %v297 = vsub.f32 %v258, %v285
    %v298 = vsub.f32 %v259, %v285
    %v299 = vsub.f32 %v260, %v285
    %v300 = vsub.f32 %v261, %v285
    %v301 = vsub.f32 %v262, %v285
    %v302 = vmul.f32 %v286, %v286
    %v303 = vmul.f32 %v287, %v287
    %v304 = vmul.f32 %v288, %v288
    %v305 = vmul.f32 %v289, %v289
    %v306 = vmul.f32 %v290, %v290
    %v307 = vmul.f32 %v291, %v291
    %v308 = vmul.f32 %v292, %v292
    %v309 = vmul.f32 %v293, %v293
    %v310 = vmul.f32 %v294, %v294
    %v311 = vmul.f32 %v295, %v295
    %v312 = vmul.f32 %v296, %v296
    %v313 = vmul.f32 %v297, %v297
    %v314 = vmul.f32 %v298, %v298
    %v315 = vmul.f32 %v299, %v299
    %v316 = vmul.f32 %v300, %v300
    %v317 = vmul.f32 %v301, %v301
    %v318 = vadd.f32 %v302, %v303
    %v319 = vadd.f32 %v318, %v304
    %v320 = vadd.f32 %v319, %v305
    %v321 = vadd.f32 %v320, %v306
    %v322 = vadd.f32 %v321, %v307
    %v323 = vadd.f32 %v322, %v308
    %v324 = vadd.f32 %v323, %v309
    %v325 = vadd.f32 %v324, %v310
    %v326 = vadd.f32 %v325, %v311
    %v327 = vadd.f32 %v326, %v312
    %v328 = vadd.f32 %v327, %v313
    %v329 = vadd.f32 %v328, %v314
    %v330 = vadd.f32 %v329, %v315
    %v331 = vadd.f32 %v330, %v316
    %v332 = vadd.f32 %v331, %v317
    %v333 = vrot.slane %v332, 4
    %v334 = vadd.f32 %v332, %v333
    %v335 = vrot.slane %v334, 2
    %v336 = vadd.f32 %v334, %v335
    %v337 = vrot.slane %v336, 1
    %v338 = vadd.f32 %v336, %v337
    %v339 = vmul.f32 %v338, %v284
    %v340 = vadd.f32 %v339, 1e-05
    %v341 = vrsqrt.pop %v340
    %v342 = vmul.f32 %v286, %v341
    %v343 = vmul.f32 %v287, %v341
    %v344 = vmul.f32 %v288, %v341
    %v345 = vmul.f32 %v289, %v341
    %v346 = vmul.f32 %v290, %v341
    %v347 = vmul.f32 %v291, %v341
    %v348 = vmul.f32 %v292, %v341
    %v349 = vmul.f32 %v293, %v341
    %v350 = vmul.f32 %v294, %v341
    %v351 = vmul.f32 %v295, %v341
    %v352 = vmul.f32 %v296, %v341
    %v353 = vmul.f32 %v297, %v341
    %v354 = vmul.f32 %v298, %v341
    %v355 = vmul.f32 %v299, %v341
    %v356 = vmul.f32 %v300, %v341
    %v357 = vmul.f32 %v301, %v341
    %v358 = vld [vmem:[%s2 + $0x1] sm:$0x1]
    %v359 = vlaneseq
    %v360 = vshrl.u32 %v359, 7
    %v361 = vsub.s32 0, %v360
    %v362 = vrot.slane %v358, %v361
    %v363 = vmul.f32 %v342, %v362
    %v364 = vmul.f32 %v343, %v362
    %v365 = vmul.f32 %v344, %v362
    %v366 = vmul.f32 %v345, %v362
    %v367 = vmul.f32 %v346, %v362
    %v368 = vmul.f32 %v347, %v362
    %v369 = vmul.f32 %v348, %v362
    %v370 = vmul.f32 %v349, %v362
    %v371 = vmul.f32 %v350, %v362
    %v372 = vmul.f32 %v351, %v362
    %v373 = vmul.f32 %v352, %v362
    %v374 = vmul.f32 %v353, %v362
    %v375 = vmul.f32 %v354, %v362
    %v376 = vmul.f32 %v355, %v362
    %v377 = vmul.f32 %v356, %v362
    %v378 = vmul.f32 %v357, %v362
    %v379 = vld [vmem:[%s2 + $0x2] sm:$0x1]
    %v380 = vlaneseq
    %v381 = vshrl.u32 %v380, 7
    %v382 = vsub.s32 0, %v381
    %v383 = vrot.slane %v379, %v382
    %v384 = vadd.f32 %v363, %v383
    %v385 = vadd.f32 %v364, %v383
    %v386 = vadd.f32 %v365, %v383
    %v387 = vadd.f32 %v366, %v383
    %v388 = vadd.f32 %v367, %v383
    %v389 = vadd.f32 %v368, %v383
    %v390 = vadd.f32 %v369, %v383
    %v391 = vadd.f32 %v370, %v383
    %v392 = vadd.f32 %v371, %v383
    %v393 = vadd.f32 %v372, %v383
    %v394 = vadd.f32 %v373, %v383
    %v395 = vadd.f32 %v374, %v383
    %v396 = vadd.f32 %v375, %v383
    %v397 = vadd.f32 %v376, %v383
    %v398 = vadd.f32 %v377, %v383
    %v399 = vadd.f32 %v378, %v383
    %v400 = vld [vmem:[#allocation2 + $0x80] sm:$0xff]
    %v401 = vld [vmem:[#allocation2 + $0x88] sm:$0xff]
    %v402 = vld [vmem:[#allocation2 + $0x90] sm:$0xff]
    %v403 = vld [vmem:[#allocation2 + $0x98] sm:$0xff]
    %v404 = vld [vmem:[#allocation2 + $0xa0] sm:$0xff]
    %v405 = vld [vmem:[#allocation2 + $0xa8] sm:$0xff]
    %v406 = vld [vmem:[#allocation2 + $0xb0] sm:$0xff]
    %v407 = vld [vmem:[#allocation2 + $0xb8] sm:$0xff]
    %v408 = vld [vmem:[#allocation2 + $0xc0] sm:$0xff]
    %v409 = vld [vmem:[#allocation2 + $0xc8] sm:$0xff]
    %v410 = vld [vmem:[#allocation2 + $0xd0] sm:$0xff]
    %v411 = vld [vmem:[#allocation2 + $0xd8] sm:$0xff]
    %v412 = vld [vmem:[#allocation2 + $0xe0] sm:$0xff]
    %v413 = vld [vmem:[#allocation2 + $0xe8] sm:$0xff]
    %v414 = vld [vmem:[#allocation2 + $0xf0] sm:$0xff]
    %v415 = vld [vmem:[#allocation2 + $0xf8] sm:$0xff]
    %v416 = vld [vmem:[%s2 + $0x3] sm:$0x1]
    %v417 = vlaneseq
    %v418 = vshrl.u32 %v417, 7
    %v419 = vsub.s32 0, %v418
    %v420 = vrot.slane %v416, %v419
    %421 = vmatprep.subr.mxu0 0.0
    %422 = vmatpush1.msra.mxu0 %v400
    %423 = vmatprep.subr.mxu0 0.0
    %424 = vmatpush1.msra.mxu0 %v401
    %425 = vmatprep.subr.mxu0 0.0
    %426 = vmatpush1.msra.mxu0 %v402
    %427 = vmatprep.subr.mxu0 0.0
    %428 = vmatpush1.msra.mxu0 %v403
    %429 = vmatprep.subr.mxu0 0.0
    %430 = vmatpush1.msra.mxu0 %v404
    %431 = vmatprep.subr.mxu0 0.0
    %432 = vmatpush1.msra.mxu0 %v405
    %433 = vmatprep.subr.mxu0 0.0
    %434 = vmatpush1.msra.mxu0 %v406
    %435 = vmatprep.subr.mxu0 0.0
    %436 = vmatpush1.msra.mxu0 %v407
    %437 = vmatprep.subr.mxu0 0.0
    %438 = vmatpush1.msra.mxu0 %v408
    %439 = vmatprep.subr.mxu0 0.0
    %440 = vmatpush1.msra.mxu0 %v409
    %441 = vmatprep.subr.mxu0 0.0
    %442 = vmatpush1.msra.mxu0 %v410
    %443 = vmatprep.subr.mxu0 0.0
    %444 = vmatpush1.msra.mxu0 %v411
    %445 = vmatprep.subr.mxu0 0.0
    %446 = vmatpush1.msra.mxu0 %v412
    %447 = vmatprep.subr.mxu0 0.0
    %448 = vmatpush1.msra.mxu0 %v413
    %449 = vmatprep.subr.mxu0 0.0
    %450 = vmatpush1.msra.mxu0 %v414
    %451 = vmatprep.subr.mxu0 0.0
    %452 = vmatpush1.msra.mxu0 %v415
    %453 = vmatprep.subr.mxu0 0.0
    %454 = vmatpush1.msra.mxu0 0.0
    %455 = vmatprep.subr.mxu0 0.0
    %456 = vmatpush1.msra.mxu0 0.0
    %457 = vmatprep.subr.mxu0 0.0
    %458 = vmatpush1.msra.mxu0 0.0
    %459 = vmatprep.subr.mxu0 0.0
    %460 = vmatpush1.msra.mxu0 0.0
    %461 = vmatprep.subr.mxu0 0.0
    %462 = vmatpush1.msra.mxu0 0.0
    %463 = vmatprep.subr.mxu0 0.0
    %464 = vmatpush1.msra.mxu0 0.0
    %465 = vmatprep.subr.mxu0 0.0
    %466 = vmatpush1.msra.mxu0 0.0
    %467 = vmatprep.subr.mxu0 0.0
    %468 = vmatpush1.msra.mxu0 0.0
    %469 = vmatprep.subr.mxu0 0.0
    %470 = vmatpush1.msra.mxu0 0.0
    %471 = vmatprep.subr.mxu0 0.0
    %472 = vmatpush1.msra.mxu0 0.0
    %473 = vmatprep.subr.mxu0 0.0
    %474 = vmatpush1.msra.mxu0 0.0
    %475 = vmatprep.subr.mxu0 0.0
    %476 = vmatpush1.msra.mxu0 0.0
    %477 = vmatprep.subr.mxu0 0.0
    %478 = vmatpush1.msra.mxu0 0.0
    %479 = vmatprep.subr.mxu0 0.0
    %480 = vmatpush1.msra.mxu0 0.0
    %481 = vmatprep.subr.mxu0 0.0
    %482 = vmatpush1.msra.mxu0 0.0
    %483 = vmatprep.subr.mxu0 0.0
    %484 = vmatpush1.msra.mxu0 0.0
    %485 = vmatprep.mubr.f32.mxu0 0.0
    %486 = vmatmul.mubr.f32.gmra.mrb[0].mxu0 %v384
    %v487 = vpop.f32.mrb[0].mxu0
    %v488 = vadd.f32 %v420, %v487
    %v489 = vpop.f32.mrb[0].mxu0
    %490 = vmatprep.mubr.f32.mxu0 0.0
    %491 = vmatmul.mubr.f32.gmra.mrb[0].mxu0 %v385
    %v492 = vpop.f32.mrb[0].mxu0
    %v493 = vadd.f32 %v420, %v492
    %v494 = vpop.f32.mrb[0].mxu0
    %495 = vmatprep.mubr.f32.mxu0 0.0
    %496 = vmatmul.mubr.f32.gmra.mrb[0].mxu0 %v386
    %v497 = vpop.f32.mrb[0].mxu0
    %v498 = vadd.f32 %v420, %v497
    %v499 = vpop.f32.mrb[0].mxu0
    %500 = vmatprep.mubr.f32.mxu0 0.0
    %501 = vmatmul.mubr.f32.gmra.mrb[0].mxu0 %v387
    %v502 = vpop.f32.mrb[0].mxu0
    %v503 = vadd.f32 %v420, %v502
    %v504 = vpop.f32.mrb[0].mxu0
    %505 = vmatprep.mubr.f32.mxu0 0.0
    %506 = vmatmul.mubr.f32.gmra.mrb[0].mxu0 %v388
    %v507 = vpop.f32.mrb[0].mxu0
    %v508 = vadd.f32 %v420, %v507
    %v509 = vpop.f32.mrb[0].mxu0
    %510 = vmatprep.mubr.f32.mxu0 0.0
    %511 = vmatmul.mubr.f32.gmra.mrb[0].mxu0 %v389
    %v512 = vpop.f32.mrb[0].mxu0
    %v513 = vadd.f32 %v420, %v512
    %v514 = vpop.f32.mrb[0].mxu0
    %515 = vmatprep.mubr.f32.mxu0 0.0
    %516 = vmatmul.mubr.f32.gmra.mrb[0].mxu0 %v390
    %v517 = vpop.f32.mrb[0].mxu0
    %v518 = vadd.f32 %v420, %v517
    %v519 = vpop.f32.mrb[0].mxu0
    %520 = vmatprep.mubr.f32.mxu0 0.0
    %521 = vmatmul.mubr.f32.gmra.mrb[0].mxu0 %v391
    %v522 = vpop.f32.mrb[0].mxu0
    %v523 = vadd.f32 %v420, %v522
    %v524 = vpop.f32.mrb[0].mxu0
    %525 = vmatprep.mubr.f32.mxu0 0.0
    %526 = vmatmul.mubr.f32.gmra.mrb[0].mxu0 %v392
    %v527 = vpop.f32.mrb[0].mxu0
    %v528 = vadd.f32 %v420, %v527
    %v529 = vpop.f32.mrb[0].mxu0
    %530 = vmatprep.mubr.f32.mxu0 0.0
    %531 = vmatmul.mubr.f32.gmra.mrb[0].mxu0 %v393
    %v532 = vpop.f32.mrb[0].mxu0
    %v533 = vadd.f32 %v420, %v532
    %v534 = vpop.f32.mrb[0].mxu0
    %535 = vmatprep.mubr.f32.mxu0 0.0
    %536 = vmatmul.mubr.f32.gmra.mrb[0].mxu0 %v394
    %v537 = vpop.f32.mrb[0].mxu0
    %v538 = vadd.f32 %v420, %v537
    %v539 = vpop.f32.mrb[0].mxu0
    %540 = vmatprep.mubr.f32.mxu0 0.0
    %541 = vmatmul.mubr.f32.gmra.mrb[0].mxu0 %v395
    %v542 = vpop.f32.mrb[0].mxu0
    %v543 = vadd.f32 %v420, %v542
    %v544 = vpop.f32.mrb[0].mxu0
    %545 = vmatprep.mubr.f32.mxu0 0.0
    %546 = vmatmul.mubr.f32.gmra.mrb[0].mxu0 %v396
    %v547 = vpop.f32.mrb[0].mxu0
    %v548 = vadd.f32 %v420, %v547
    %v549 = vpop.f32.mrb[0].mxu0
    %550 = vmatprep.mubr.f32.mxu0 0.0
    %551 = vmatmul.mubr.f32.gmra.mrb[0].mxu0 %v397
    %v552 = vpop.f32.mrb[0].mxu0
    %v553 = vadd.f32 %v420, %v552
    %v554 = vpop.f32.mrb[0].mxu0
    %555 = vmatprep.mubr.f32.mxu0 0.0
    %556 = vmatmul.mubr.f32.gmra.mrb[0].mxu0 %v398
    %v557 = vpop.f32.mrb[0].mxu0
    %v558 = vadd.f32 %v420, %v557
    %v559 = vpop.f32.mrb[0].mxu0
    %560 = vmatprep.mubr.f32.mxu0 0.0
    %561 = vmatmul.mubr.f32.gmra.mrb[0].mxu0 %v399
    %v562 = vpop.f32.mrb[0].mxu0
    %v563 = vadd.f32 %v420, %v562
    %v564 = vpop.f32.mrb[0].mxu0
    %565 = vdwg.mxu0
    %v566 = vmax.f32 %v488, 0.0
    %v567 = vmax.f32 %v493, 0.0
    %v568 = vmax.f32 %v498, 0.0
    %v569 = vmax.f32 %v503, 0.0
    %v570 = vmax.f32 %v508, 0.0
    %v571 = vmax.f32 %v513, 0.0
    %v572 = vmax.f32 %v518, 0.0
    %v573 = vmax.f32 %v523, 0.0
    %v574 = vmax.f32 %v528, 0.0
    %v575 = vmax.f32 %v533, 0.0
    %v576 = vmax.f32 %v538, 0.0
    %v577 = vmax.f32 %v543, 0.0
    %v578 = vmax.f32 %v548, 0.0
    %v579 = vmax.f32 %v553, 0.0
    %v580 = vmax.f32 %v558, 0.0
    %v581 = vmax.f32 %v563, 0.0
    %v582 = vadd.f32 %v566, %v567
    %v583 = vadd.f32 %v582, %v568
    %v584 = vadd.f32 %v583, %v569
    %v585 = vadd.f32 %v584, %v570
    %v586 = vadd.f32 %v585, %v571
    %v587 = vadd.f32 %v586, %v572
    %v588 = vadd.f32 %v587, %v573
    %v589 = vadd.f32 %v588, %v574
    %v590 = vadd.f32 %v589, %v575
    %v591 = vadd.f32 %v590, %v576
    %v592 = vadd.f32 %v591, %v577
    %v593 = vadd.f32 %v592, %v578
    %v594 = vadd.f32 %v593, %v579
    %v595 = vadd.f32 %v594, %v580
    %v596 = vadd.f32 %v595, %v581
    %v597 = vrot.slane %v596, 4
    %v598 = vadd.f32 %v596, %v597
    %v599 = vrot.slane %v598, 2
    %v600 = vadd.f32 %v598, %v599
    %v601 = vrot.slane %v600, 1
    %v602 = vadd.f32 %v600, %v601
    %v603 = vmul.f32 %v602, %v284
    %v604 = vsub.f32 %v566, %v603
    %v605 = vsub.f32 %v567, %v603
    %v606 = vsub.f32 %v568, %v603
    %v607 = vsub.f32 %v569, %v603
    %v608 = vsub.f32 %v570, %v603
    %v609 = vsub.f32 %v571, %v603
    %v610 = vsub.f32 %v572, %v603
    %v611 = vsub.f32 %v573, %v603
    %v612 = vsub.f32 %v574, %v603
    %v613 = vsub.f32 %v575, %v603
    %v614 = vsub.f32 %v576, %v603
    %v615 = vsub.f32 %v577, %v603
    %v616 = vsub.f32 %v578, %v603
    %v617 = vsub.f32 %v579, %v603
    %v618 = vsub.f32 %v580, %v603
    %v619 = vsub.f32 %v581, %v603
    %v620 = vmul.f32 %v604, %v604
    %v621 = vmul.f32 %v605, %v605
    %v622 = vmul.f32 %v606, %v606
    %v623 = vmul.f32 %v607, %v607
    %v624 = vmul.f32 %v608, %v608
    %v625 = vmul.f32 %v609, %v609
    %v626 = vmul.f32 %v610, %v610
    %v627 = vmul.f32 %v611, %v611
    %v628 = vmul.f32 %v612, %v612
    %v629 = vmul.f32 %v613, %v613
    %v630 = vmul.f32 %v614, %v614
    %v631 = vmul.f32 %v615, %v615
    %v632 = vmul.f32 %v616, %v616
    %v633 = vmul.f32 %v617, %v617
    %v634 = vmul.f32 %v618, %v618
    %v635 = vmul.f32 %v619, %v619
    %v636 = vadd.f32 %v620, %v621
    %v637 = vadd.f32 %v636, %v622
    %v638 = vadd.f32 %v637, %v623
    %v639 = vadd.f32 %v638, %v624
    %v640 = vadd.f32 %v639, %v625
    %v641 = vadd.f32 %v640, %v626
    %v642 = vadd.f32 %v641, %v627
    %v643 = vadd.f32 %v642, %v628
    %v644 = vadd.f32 %v643, %v629
    %v645 = vadd.f32 %v644, %v630
    %v646 = vadd.f32 %v645, %v631
    %v647 = vadd.f32 %v646, %v632
    %v648 = vadd.f32 %v647, %v633
    %v649 = vadd.f32 %v648, %v634
    %v650 = vadd.f32 %v649, %v635
    %v651 = vrot.slane %v650, 4
    %v652 = vadd.f32 %v650, %v651
    %v653 = vrot.slane %v652, 2
    %v654 = vadd.f32 %v652, %v653
    %v655 = vrot.slane %v654, 1
    %v656 = vadd.f32 %v654, %v655
    %v657 = vmul.f32 %v656, %v284
    %v658 = vadd.f32 %v657, 1e-05
    %v659 = vrsqrt.pop %v658
    %v660 = vmul.f32 %v604, %v659
    %v661 = vmul.f32 %v605, %v659
    %v662 = vmul.f32 %v606, %v659
    %v663 = vmul.f32 %v607, %v659
    %v664 = vmul.f32 %v608, %v659
    %v665 = vmul.f32 %v609, %v659
    %v666 = vmul.f32 %v610, %v659
    %v667 = vmul.f32 %v611, %v659
    %v668 = vmul.f32 %v612, %v659
    %v669 = vmul.f32 %v613, %v659
    %v670 = vmul.f32 %v614, %v659
    %v671 = vmul.f32 %v615, %v659
    %v672 = vmul.f32 %v616, %v659
    %v673 = vmul.f32 %v617, %v659
    %v674 = vmul.f32 %v618, %v659
    %v675 = vmul.f32 %v619, %v659
    %v676 = vld [vmem:[%s2 + $0x4] sm:$0x1]
    %v677 = vlaneseq
    %v678 = vshrl.u32 %v677, 7
    %v679 = vsub.s32 0, %v678
    %v680 = vrot.slane %v676, %v679
    %v681 = vmul.f32 %v660, %v680
    %v682 = vmul.f32 %v661, %v680
    %v683 = vmul.f32 %v662, %v680
    %v684 = vmul.f32 %v663, %v680
    %v685 = vmul.f32 %v664, %v680
    %v686 = vmul.f32 %v665, %v680
    %v687 = vmul.f32 %v666, %v680
    %v688 = vmul.f32 %v667, %v680
    %v689 = vmul.f32 %v668, %v680
    %v690 = vmul.f32 %v669, %v680
    %v691 = vmul.f32 %v670, %v680
    %v692 = vmul.f32 %v671, %v680
    %v693 = vmul.f32 %v672, %v680
    %v694 = vmul.f32 %v673, %v680
    %v695 = vmul.f32 %v674, %v680
    %v696 = vmul.f32 %v675, %v680
    %v697 = vld [vmem:[%s2 + $0x5] sm:$0x1]
    %v698 = vlaneseq
    %v699 = vshrl.u32 %v698, 7
    %v700 = vsub.s32 0, %v699
    %v701 = vrot.slane %v697, %v700
    %v702 = vadd.f32 %v681, %v701
    %v703 = vadd.f32 %v682, %v701
    %v704 = vadd.f32 %v683, %v701
    %v705 = vadd.f32 %v684, %v701
    %v706 = vadd.f32 %v685, %v701
    %v707 = vadd.f32 %v686, %v701
    %v708 = vadd.f32 %v687, %v701
    %v709 = vadd.f32 %v688, %v701
    %v710 = vadd.f32 %v689, %v701
    %v711 = vadd.f32 %v690, %v701
    %v712 = vadd.f32 %v691, %v701
    %v713 = vadd.f32 %v692, %v701
    %v714 = vadd.f32 %v693, %v701
    %v715 = vadd.f32 %v694, %v701
    %v716 = vadd.f32 %v695, %v701
    %v717 = vadd.f32 %v696, %v701
    %v718 = vld [vmem:[#allocation2 + $0x100] sm:$0xff]
    %v719 = vld [vmem:[#allocation2 + $0x108] sm:$0xff]
    %v720 = vld [vmem:[#allocation2 + $0x110] sm:$0xff]
    %v721 = vld [vmem:[#allocation2 + $0x118] sm:$0xff]
    %v722 = vld [vmem:[#allocation2 + $0x120] sm:$0xff]
    %v723 = vld [vmem:[#allocation2 + $0x128] sm:$0xff]
    %v724 = vld [vmem:[#allocation2 + $0x130] sm:$0xff]
    %v725 = vld [vmem:[#allocation2 + $0x138] sm:$0xff]
    %v726 = vld [vmem:[#allocation2 + $0x140] sm:$0xff]
    %v727 = vld [vmem:[#allocation2 + $0x148] sm:$0xff]
    %v728 = vld [vmem:[#allocation2 + $0x150] sm:$0xff]
    %v729 = vld [vmem:[#allocation2 + $0x158] sm:$0xff]
    %v730 = vld [vmem:[#allocation2 + $0x160] sm:$0xff]
    %v731 = vld [vmem:[#allocation2 + $0x168] sm:$0xff]
    %v732 = vld [vmem:[#allocation2 + $0x170] sm:$0xff]
    %v733 = vld [vmem:[#allocation2 + $0x178] sm:$0xff]
    %v734 = vld [vmem:[%s2 + $0x6] sm:$0x1]
    %v735 = vlaneseq
    %v736 = vshrl.u32 %v735, 7
    %v737 = vsub.s32 0, %v736
    %v738 = vrot.slane %v734, %v737
    %739 = vmatprep.subr.mxu0 0.0
    %740 = vmatpush1.msra.mxu0 %v718
    %741 = vmatprep.subr.mxu0 0.0
    %742 = vmatpush1.msra.mxu0 %v719
    %743 = vmatprep.subr.mxu0 0.0
    %744 = vmatpush1.msra.mxu0 %v720
    %745 = vmatprep.subr.mxu0 0.0
    %746 = vmatpush1.msra.mxu0 %v721
    %747 = vmatprep.subr.mxu0 0.0
    %748 = vmatpush1.msra.mxu0 %v722
    %749 = vmatprep.subr.mxu0 0.0
    %750 = vmatpush1.msra.mxu0 %v723
    %751 = vmatprep.subr.mxu0 0.0
    %752 = vmatpush1.msra.mxu0 %v724
    %753 = vmatprep.subr.mxu0 0.0
    %754 = vmatpush1.msra.mxu0 %v725
    %755 = vmatprep.subr.mxu0 0.0
    %756 = vmatpush1.msra.mxu0 %v726
    %757 = vmatprep.subr.mxu0 0.0
    %758 = vmatpush1.msra.mxu0 %v727
    %759 = vmatprep.subr.mxu0 0.0
    %760 = vmatpush1.msra.mxu0 %v728
    %761 = vmatprep.subr.mxu0 0.0
    %762 = vmatpush1.msra.mxu0 %v729
    %763 = vmatprep.subr.mxu0 0.0
    %764 = vmatpush1.msra.mxu0 %v730
    %765 = vmatprep.subr.mxu0 0.0
    %766 = vmatpush1.msra.mxu0 %v731
    %767 = vmatprep.subr.mxu0 0.0
    %768 = vmatpush1.msra.mxu0 %v732
    %769 = vmatprep.subr.mxu0 0.0
    %770 = vmatpush1.msra.mxu0 %v733
    %771 = vmatprep.subr.mxu0 0.0
    %772 = vmatpush1.msra.mxu0 0.0
    %773 = vmatprep.subr.mxu0 0.0
    %774 = vmatpush1.msra.mxu0 0.0
    %775 = vmatprep.subr.mxu0 0.0
    %776 = vmatpush1.msra.mxu0 0.0
    %777 = vmatprep.subr.mxu0 0.0
    %778 = vmatpush1.msra.mxu0 0.0
    %779 = vmatprep.subr.mxu0 0.0
    %780 = vmatpush1.msra.mxu0 0.0
    %781 = vmatprep.subr.mxu0 0.0
    %782 = vmatpush1.msra.mxu0 0.0
    %783 = vmatprep.subr.mxu0 0.0
    %784 = vmatpush1.msra.mxu0 0.0
    %785 = vmatprep.subr.mxu0 0.0
    %786 = vmatpush1.msra.mxu0 0.0
    %787 = vmatprep.subr.mxu0 0.0
    %788 = vmatpush1.msra.mxu0 0.0
    %789 = vmatprep.subr.mxu0 0.0
    %790 = vmatpush1.msra.mxu0 0.0
    %791 = vmatprep.subr.mxu0 0.0
    %792 = vmatpush1.msra.mxu0 0.0
    %793 = vmatprep.subr.mxu0 0.0
    %794 = vmatpush1.msra.mxu0 0.0
    %795 = vmatprep.subr.mxu0 0.0
    %796 = vmatpush1.msra.mxu0 0.0
    %797 = vmatprep.subr.mxu0 0.0
    %798 = vmatpush1.msra.mxu0 0.0
    %799 = vmatprep.subr.mxu0 0.0
    %800 = vmatpush1.msra.mxu0 0.0
    %801 = vmatprep.subr.mxu0 0.0
    %802 = vmatpush1.msra.mxu0 0.0
    %803 = vmatprep.mubr.f32.mxu0 0.0
    %804 = vmatmul.mubr.f32.gmra.mrb[0].mxu0 %v702
    %v805 = vpop.f32.mrb[0].mxu0
    %v806 = vadd.f32 %v738, %v805
    %v807 = vpop.f32.mrb[0].mxu0
    %808 = vmatprep.mubr.f32.mxu0 0.0
    %809 = vmatmul.mubr.f32.gmra.mrb[0].mxu0 %v703
    %v810 = vpop.f32.mrb[0].mxu0
    %v811 = vadd.f32 %v738, %v810
    %v812 = vpop.f32.mrb[0].mxu0
    %813 = vmatprep.mubr.f32.mxu0 0.0
    %814 = vmatmul.mubr.f32.gmra.mrb[0].mxu0 %v704
    %v815 = vpop.f32.mrb[0].mxu0
    %v816 = vadd.f32 %v738, %v815
    %v817 = vpop.f32.mrb[0].mxu0
    %818 = vmatprep.mubr.f32.mxu0 0.0
    %819 = vmatmul.mubr.f32.gmra.mrb[0].mxu0 %v705
    %v820 = vpop.f32.mrb[0].mxu0
    %v821 = vadd.f32 %v738, %v820
    %v822 = vpop.f32.mrb[0].mxu0
    %823 = vmatprep.mubr.f32.mxu0 0.0
    %824 = vmatmul.mubr.f32.gmra.mrb[0].mxu0 %v706
    %v825 = vpop.f32.mrb[0].mxu0
    %v826 = vadd.f32 %v738, %v825
    %v827 = vpop.f32.mrb[0].mxu0
    %828 = vmatprep.mubr.f32.mxu0 0.0
    %829 = vmatmul.mubr.f32.gmra.mrb[0].mxu0 %v707
    %v830 = vpop.f32.mrb[0].mxu0
    %v831 = vadd.f32 %v738, %v830
    %v832 = vpop.f32.mrb[0].mxu0
    %833 = vmatprep.mubr.f32.mxu0 0.0
    %834 = vmatmul.mubr.f32.gmra.mrb[0].mxu0 %v708
    %v835 = vpop.f32.mrb[0].mxu0
    %v836 = vadd.f32 %v738, %v835
    %v837 = vpop.f32.mrb[0].mxu0
    %838 = vmatprep.mubr.f32.mxu0 0.0
    %839 = vmatmul.mubr.f32.gmra.mrb[0].mxu0 %v709
    %v840 = vpop.f32.mrb[0].mxu0
    %v841 = vadd.f32 %v738, %v840
    %v842 = vpop.f32.mrb[0].mxu0
    %843 = vmatprep.mubr.f32.mxu0 0.0
    %844 = vmatmul.mubr.f32.gmra.mrb[0].mxu0 %v710
    %v845 = vpop.f32.mrb[0].mxu0
    %v846 = vadd.f32 %v738, %v845
    %v847 = vpop.f32.mrb[0].mxu0
    %848 = vmatprep.mubr.f32.mxu0 0.0
    %849 = vmatmul.mubr.f32.gmra.mrb[0].mxu0 %v711
    %v850 = vpop.f32.mrb[0].mxu0
    %v851 = vadd.f32 %v738, %v850
    %v852 = vpop.f32.mrb[0].mxu0
    %853 = vmatprep.mubr.f32.mxu0 0.0
    %854 = vmatmul.mubr.f32.gmra.mrb[0].mxu0 %v712
    %v855 = vpop.f32.mrb[0].mxu0
    %v856 = vadd.f32 %v738, %v855
    %v857 = vpop.f32.mrb[0].mxu0
    %858 = vmatprep.mubr.f32.mxu0 0.0
    %859 = vmatmul.mubr.f32.gmra.mrb[0].mxu0 %v713
    %v860 = vpop.f32.mrb[0].mxu0
    %v861 = vadd.f32 %v738, %v860
    %v862 = vpop.f32.mrb[0].mxu0
    %863 = vmatprep.mubr.f32.mxu0 0.0
    %864 = vmatmul.mubr.f32.gmra.mrb[0].mxu0 %v714
    %v865 = vpop.f32.mrb[0].mxu0
    %v866 = vadd.f32 %v738, %v865
    %v867 = vpop.f32.mrb[0].mxu0
    %868 = vmatprep.mubr.f32.mxu0 0.0
    %869 = vmatmul.mubr.f32.gmra.mrb[0].mxu0 %v715
    %v870 = vpop.f32.mrb[0].mxu0
    %v871 = vadd.f32 %v738, %v870
    %v872 = vpop.f32.mrb[0].mxu0
    %873 = vmatprep.mubr.f32.mxu0 0.0
    %874 = vmatmul.mubr.f32.gmra.mrb[0].mxu0 %v716
    %v875 = vpop.f32.mrb[0].mxu0
    %v876 = vadd.f32 %v738, %v875
    %v877 = vpop.f32.mrb[0].mxu0
    %878 = vmatprep.mubr.f32.mxu0 0.0
    %879 = vmatmul.mubr.f32.gmra.mrb[0].mxu0 %v717
    %v880 = vpop.f32.mrb[0].mxu0
    %v881 = vadd.f32 %v738, %v880
    %v882 = vpop.f32.mrb[0].mxu0
    %883 = vdwg.mxu0
    %v884 = vmax.f32 %v806, 0.0
    %v885 = vmax.f32 %v811, 0.0
    %v886 = vmax.f32 %v816, 0.0
    %v887 = vmax.f32 %v821, 0.0
    %v888 = vmax.f32 %v826, 0.0
    %v889 = vmax.f32 %v831, 0.0
    %v890 = vmax.f32 %v836, 0.0
    %v891 = vmax.f32 %v841, 0.0
    %v892 = vmax.f32 %v846, 0.0
    %v893 = vmax.f32 %v851, 0.0
    %v894 = vmax.f32 %v856, 0.0
    %v895 = vmax.f32 %v861, 0.0
    %v896 = vmax.f32 %v866, 0.0
    %v897 = vmax.f32 %v871, 0.0
    %v898 = vmax.f32 %v876, 0.0
    %v899 = vmax.f32 %v881, 0.0
    %v900 = vadd.f32 %v884, %v885
    %v901 = vadd.f32 %v900, %v886
    %v902 = vadd.f32 %v901, %v887
    %v903 = vadd.f32 %v902, %v888
    %v904 = vadd.f32 %v903, %v889
    %v905 = vadd.f32 %v904, %v890
    %v906 = vadd.f32 %v905, %v891
    %v907 = vadd.f32 %v906, %v892
    %v908 = vadd.f32 %v907, %v893
    %v909 = vadd.f32 %v908, %v894
    %v910 = vadd.f32 %v909, %v895
    %v911 = vadd.f32 %v910, %v896
    %v912 = vadd.f32 %v911, %v897
    %v913 = vadd.f32 %v912, %v898
    %v914 = vadd.f32 %v913, %v899
    %v915 = vrot.slane %v914, 4
    %v916 = vadd.f32 %v914, %v915
    %v917 = vrot.slane %v916, 2
    %v918 = vadd.f32 %v916, %v917
    %v919 = vrot.slane %v918, 1
    %v920 = vadd.f32 %v918, %v919
    %v921 = vmul.f32 %v920, %v284
    %v922 = vsub.f32 %v884, %v921
    %v923 = vsub.f32 %v885, %v921
    %v924 = vsub.f32 %v886, %v921
    %v925 = vsub.f32 %v887, %v921
    %v926 = vsub.f32 %v888, %v921
    %v927 = vsub.f32 %v889, %v921
    %v928 = vsub.f32 %v890, %v921
    %v929 = vsub.f32 %v891, %v921
    %v930 = vsub.f32 %v892, %v921
    %v931 = vsub.f32 %v893, %v921
    %v932 = vsub.f32 %v894, %v921
    %v933 = vsub.f32 %v895, %v921
    %v934 = vsub.f32 %v896, %v921
    %v935 = vsub.f32 %v897, %v921
    %v936 = vsub.f32 %v898, %v921
    %v937 = vsub.f32 %v899, %v921
    %v938 = vmul.f32 %v922, %v922
    %v939 = vmul.f32 %v923, %v923
    %v940 = vmul.f32 %v924, %v924
    %v941 = vmul.f32 %v925, %v925
    %v942 = vmul.f32 %v926, %v926
    %v943 = vmul.f32 %v927, %v927
    %v944 = vmul.f32 %v928, %v928
    %v945 = vmul.f32 %v929, %v929
    %v946 = vmul.f32 %v930, %v930
    %v947 = vmul.f32 %v931, %v931
    %v948 = vmul.f32 %v932, %v932
    %v949 = vmul.f32 %v933, %v933
    %v950 = vmul.f32 %v934, %v934
    %v951 = vmul.f32 %v935, %v935
    %v952 = vmul.f32 %v936, %v936
    %v953 = vmul.f32 %v937, %v937
    %v954 = vadd.f32 %v938, %v939
    %v955 = vadd.f32 %v954, %v940
    %v956 = vadd.f32 %v955, %v941
    %v957 = vadd.f32 %v956, %v942
    %v958 = vadd.f32 %v957, %v943
    %v959 = vadd.f32 %v958, %v944
    %v960 = vadd.f32 %v959, %v945
    %v961 = vadd.f32 %v960, %v946
    %v962 = vadd.f32 %v961, %v947
    %v963 = vadd.f32 %v962, %v948
    %v964 = vadd.f32 %v963, %v949
    %v965 = vadd.f32 %v964, %v950
    %v966 = vadd.f32 %v965, %v951
    %v967 = vadd.f32 %v966, %v952
    %v968 = vadd.f32 %v967, %v953
    %v969 = vrot.slane %v968, 4
    %v970 = vadd.f32 %v968, %v969
    %v971 = vrot.slane %v970, 2
    %v972 = vadd.f32 %v970, %v971
    %v973 = vrot.slane %v972, 1
    %v974 = vadd.f32 %v972, %v973
    %v975 = vmul.f32 %v974, %v284
    %v976 = vadd.f32 %v975, 1e-05
    %v977 = vrsqrt.pop %v976
    %v978 = vmul.f32 %v922, %v977
    %v979 = vmul.f32 %v923, %v977
    %v980 = vmul.f32 %v924, %v977
    %v981 = vmul.f32 %v925, %v977
    %v982 = vmul.f32 %v926, %v977
    %v983 = vmul.f32 %v927, %v977
    %v984 = vmul.f32 %v928, %v977
    %v985 = vmul.f32 %v929, %v977
    %v986 = vmul.f32 %v930, %v977
    %v987 = vmul.f32 %v931, %v977
    %v988 = vmul.f32 %v932, %v977
    %v989 = vmul.f32 %v933, %v977
    %v990 = vmul.f32 %v934, %v977
    %v991 = vmul.f32 %v935, %v977
    %v992 = vmul.f32 %v936, %v977
    %v993 = vmul.f32 %v937, %v977
    %v994 = vld [vmem:[%s2 + $0x7] sm:$0x1]
    %v995 = vlaneseq
    %v996 = vshrl.u32 %v995, 7
    %v997 = vsub.s32 0, %v996
    %v998 = vrot.slane %v994, %v997
    %v999 = vmul.f32 %v978, %v998
    %v1000 = vmul.f32 %v979, %v998
    %v1001 = vmul.f32 %v980, %v998
    %v1002 = vmul.f32 %v981, %v998
    %v1003 = vmul.f32 %v982, %v998
    %v1004 = vmul.f32 %v983, %v998
    %v1005 = vmul.f32 %v984, %v998
    %v1006 = vmul.f32 %v985, %v998
    %v1007 = vmul.f32 %v986, %v998
    %v1008 = vmul.f32 %v987, %v998
    %v1009 = vmul.f32 %v988, %v998
    %v1010 = vmul.f32 %v989, %v998
    %v1011 = vmul.f32 %v990, %v998
    %v1012 = vmul.f32 %v991, %v998
    %v1013 = vmul.f32 %v992, %v998
    %v1014 = vmul.f32 %v993, %v998
    %v1015 = vld [vmem:[%s2 + $0x8] sm:$0x1]
    %v1016 = vlaneseq
    %v1017 = vshrl.u32 %v1016, 7
    %v1018 = vsub.s32 0, %v1017
    %v1019 = vrot.slane %v1015, %v1018
    %v1020 = vadd.f32 %v999, %v1019
    %v1021 = vadd.f32 %v1000, %v1019
    %v1022 = vadd.f32 %v1001, %v1019
    %v1023 = vadd.f32 %v1002, %v1019
    %v1024 = vadd.f32 %v1003, %v1019
    %v1025 = vadd.f32 %v1004, %v1019
    %v1026 = vadd.f32 %v1005, %v1019
    %v1027 = vadd.f32 %v1006, %v1019
    %v1028 = vadd.f32 %v1007, %v1019
    %v1029 = vadd.f32 %v1008, %v1019
    %v1030 = vadd.f32 %v1009, %v1019
    %v1031 = vadd.f32 %v1010, %v1019
    %v1032 = vadd.f32 %v1011, %v1019
    %v1033 = vadd.f32 %v1012, %v1019
    %v1034 = vadd.f32 %v1013, %v1019
    %v1035 = vadd.f32 %v1014, %v1019
    %v1036 = vld [vmem:[#allocation2 + $0x180] sm:$0xff]
    %v1037 = vld [vmem:[#allocation2 + $0x188] sm:$0xff]
    %v1038 = vld [vmem:[#allocation2 + $0x190] sm:$0xff]
    %v1039 = vld [vmem:[#allocation2 + $0x198] sm:$0xff]
    %v1040 = vld [vmem:[#allocation2 + $0x1a0] sm:$0xff]
    %v1041 = vld [vmem:[#allocation2 + $0x1a8] sm:$0xff]
    %v1042 = vld [vmem:[#allocation2 + $0x1b0] sm:$0xff]
    %v1043 = vld [vmem:[#allocation2 + $0x1b8] sm:$0xff]
    %v1044 = vld [vmem:[#allocation2 + $0x1c0] sm:$0xff]
    %v1045 = vld [vmem:[#allocation2 + $0x1c8] sm:$0xff]
    %v1046 = vld [vmem:[#allocation2 + $0x1d0] sm:$0xff]
    %v1047 = vld [vmem:[#allocation2 + $0x1d8] sm:$0xff]
    %v1048 = vld [vmem:[#allocation2 + $0x1e0] sm:$0xff]
    %v1049 = vld [vmem:[#allocation2 + $0x1e8] sm:$0xff]
    %v1050 = vld [vmem:[#allocation2 + $0x1f0] sm:$0xff]
    %v1051 = vld [vmem:[#allocation2 + $0x1f8] sm:$0xff]
    %v1052 = vld [vmem:[%s2 + $0x9] sm:$0x1]
    %v1053 = vlaneseq
    %v1054 = vshrl.u32 %v1053, 7
    %v1055 = vsub.s32 0, %v1054
    %v1056 = vrot.slane %v1052, %v1055
    %1057 = vmatprep.subr.mxu0 0.0
    %1058 = vmatpush1.msra.mxu0 %v1036
    %1059 = vmatprep.subr.mxu0 0.0
    %1060 = vmatpush1.msra.mxu0 %v1037
    %1061 = vmatprep.subr.mxu0 0.0
    %1062 = vmatpush1.msra.mxu0 %v1038
    %1063 = vmatprep.subr.mxu0 0.0
    %1064 = vmatpush1.msra.mxu0 %v1039
    %1065 = vmatprep.subr.mxu0 0.0
    %1066 = vmatpush1.msra.mxu0 %v1040
    %1067 = vmatprep.subr.mxu0 0.0
    %1068 = vmatpush1.msra.mxu0 %v1041
    %1069 = vmatprep.subr.mxu0 0.0
    %1070 = vmatpush1.msra.mxu0 %v1042
    %1071 = vmatprep.subr.mxu0 0.0
    %1072 = vmatpush1.msra.mxu0 %v1043
    %1073 = vmatprep.subr.mxu0 0.0
    %1074 = vmatpush1.msra.mxu0 %v1044
    %1075 = vmatprep.subr.mxu0 0.0
    %1076 = vmatpush1.msra.mxu0 %v1045
    %1077 = vmatprep.subr.mxu0 0.0
    %1078 = vmatpush1.msra.mxu0 %v1046
    %1079 = vmatprep.subr.mxu0 0.0
    %1080 = vmatpush1.msra.mxu0 %v1047
    %1081 = vmatprep.subr.mxu0 0.0
    %1082 = vmatpush1.msra.mxu0 %v1048
    %1083 = vmatprep.subr.mxu0 0.0
    %1084 = vmatpush1.msra.mxu0 %v1049
    %1085 = vmatprep.subr.mxu0 0.0
    %1086 = vmatpush1.msra.mxu0 %v1050
    %1087 = vmatprep.subr.mxu0 0.0
    %1088 = vmatpush1.msra.mxu0 %v1051
    %1089 = vmatprep.subr.mxu0 0.0
    %1090 = vmatpush1.msra.mxu0 0.0
    %1091 = vmatprep.subr.mxu0 0.0
    %1092 = vmatpush1.msra.mxu0 0.0
    %1093 = vmatprep.subr.mxu0 0.0
    %1094 = vmatpush1.msra.mxu0 0.0
    %1095 = vmatprep.subr.mxu0 0.0
    %1096 = vmatpush1.msra.mxu0 0.0
    %1097 = vmatprep.subr.mxu0 0.0
    %1098 = vmatpush1.msra.mxu0 0.0
    %1099 = vmatprep.subr.mxu0 0.0
    %1100 = vmatpush1.msra.mxu0 0.0
    %1101 = vmatprep.subr.mxu0 0.0
    %1102 = vmatpush1.msra.mxu0 0.0
    %1103 = vmatprep.subr.mxu0 0.0
    %1104 = vmatpush1.msra.mxu0 0.0
    %1105 = vmatprep.subr.mxu0 0.0
    %1106 = vmatpush1.msra.mxu0 0.0
    %1107 = vmatprep.subr.mxu0 0.0
    %1108 = vmatpush1.msra.mxu0 0.0
    %1109 = vmatprep.subr.mxu0 0.0
    %1110 = vmatpush1.msra.mxu0 0.0
    %1111 = vmatprep.subr.mxu0 0.0
    %1112 = vmatpush1.msra.mxu0 0.0
    %1113 = vmatprep.subr.mxu0 0.0
    %1114 = vmatpush1.msra.mxu0 0.0
    %1115 = vmatprep.subr.mxu0 0.0
    %1116 = vmatpush1.msra.mxu0 0.0
    %1117 = vmatprep.subr.mxu0 0.0
    %1118 = vmatpush1.msra.mxu0 0.0
    %1119 = vmatprep.subr.mxu0 0.0
    %1120 = vmatpush1.msra.mxu0 0.0
    %1121 = vmatprep.mubr.f32.mxu0 0.0
    %1122 = vmatmul.mubr.f32.gmra.mrb[0].mxu0 %v1020
    %v1123 = vpop.f32.mrb[0].mxu0
    %v1124 = vadd.f32 %v1056, %v1123
    %v1125 = vpop.f32.mrb[0].mxu0
    %1126 = vmatprep.mubr.f32.mxu0 0.0
    %1127 = vmatmul.mubr.f32.gmra.mrb[0].mxu0 %v1021
    %v1128 = vpop.f32.mrb[0].mxu0
    %v1129 = vadd.f32 %v1056, %v1128
    %v1130 = vpop.f32.mrb[0].mxu0
    %1131 = vmatprep.mubr.f32.mxu0 0.0
    %1132 = vmatmul.mubr.f32.gmra.mrb[0].mxu0 %v1022
    %v1133 = vpop.f32.mrb[0].mxu0
    %v1134 = vadd.f32 %v1056, %v1133
    %v1135 = vpop.f32.mrb[0].mxu0
    %1136 = vmatprep.mubr.f32.mxu0 0.0
    %1137 = vmatmul.mubr.f32.gmra.mrb[0].mxu0 %v1023
    %v1138 = vpop.f32.mrb[0].mxu0
    %v1139 = vadd.f32 %v1056, %v1138
    %v1140 = vpop.f32.mrb[0].mxu0
    %1141 = vmatprep.mubr.f32.mxu0 0.0
    %1142 = vmatmul.mubr.f32.gmra.mrb[0].mxu0 %v1024
    %v1143 = vpop.f32.mrb[0].mxu0
    %v1144 = vadd.f32 %v1056, %v1143
    %v1145 = vpop.f32.mrb[0].mxu0
    %1146 = vmatprep.mubr.f32.mxu0 0.0
    %1147 = vmatmul.mubr.f32.gmra.mrb[0].mxu0 %v1025
    %v1148 = vpop.f32.mrb[0].mxu0
    %v1149 = vadd.f32 %v1056, %v1148
    %v1150 = vpop.f32.mrb[0].mxu0
    %1151 = vmatprep.mubr.f32.mxu0 0.0
    %1152 = vmatmul.mubr.f32.gmra.mrb[0].mxu0 %v1026
    %v1153 = vpop.f32.mrb[0].mxu0
    %v1154 = vadd.f32 %v1056, %v1153
    %v1155 = vpop.f32.mrb[0].mxu0
    %1156 = vmatprep.mubr.f32.mxu0 0.0
    %1157 = vmatmul.mubr.f32.gmra.mrb[0].mxu0 %v1027
    %v1158 = vpop.f32.mrb[0].mxu0
    %v1159 = vadd.f32 %v1056, %v1158
    %v1160 = vpop.f32.mrb[0].mxu0
    %1161 = vmatprep.mubr.f32.mxu0 0.0
    %1162 = vmatmul.mubr.f32.gmra.mrb[0].mxu0 %v1028
    %v1163 = vpop.f32.mrb[0].mxu0
    %v1164 = vadd.f32 %v1056, %v1163
    %v1165 = vpop.f32.mrb[0].mxu0
    %1166 = vmatprep.mubr.f32.mxu0 0.0
    %1167 = vmatmul.mubr.f32.gmra.mrb[0].mxu0 %v1029
    %v1168 = vpop.f32.mrb[0].mxu0
    %v1169 = vadd.f32 %v1056, %v1168
    %v1170 = vpop.f32.mrb[0].mxu0
    %1171 = vmatprep.mubr.f32.mxu0 0.0
    %1172 = vmatmul.mubr.f32.gmra.mrb[0].mxu0 %v1030
    %v1173 = vpop.f32.mrb[0].mxu0
    %v1174 = vadd.f32 %v1056, %v1173
    %v1175 = vpop.f32.mrb[0].mxu0
    %1176 = vmatprep.mubr.f32.mxu0 0.0
    %1177 = vmatmul.mubr.f32.gmra.mrb[0].mxu0 %v1031
    %v1178 = vpop.f32.mrb[0].mxu0
    %v1179 = vadd.f32 %v1056, %v1178
    %v1180 = vpop.f32.mrb[0].mxu0
    %1181 = vmatprep.mubr.f32.mxu0 0.0
    %1182 = vmatmul.mubr.f32.gmra.mrb[0].mxu0 %v1032
    %v1183 = vpop.f32.mrb[0].mxu0
    %v1184 = vadd.f32 %v1056, %v1183
    %v1185 = vpop.f32.mrb[0].mxu0
    %1186 = vmatprep.mubr.f32.mxu0 0.0
    %1187 = vmatmul.mubr.f32.gmra.mrb[0].mxu0 %v1033
    %v1188 = vpop.f32.mrb[0].mxu0
    %v1189 = vadd.f32 %v1056, %v1188
    %v1190 = vpop.f32.mrb[0].mxu0
    %1191 = vmatprep.mubr.f32.mxu0 0.0
    %1192 = vmatmul.mubr.f32.gmra.mrb[0].mxu0 %v1034
    %v1193 = vpop.f32.mrb[0].mxu0
    %v1194 = vadd.f32 %v1056, %v1193
    %v1195 = vpop.f32.mrb[0].mxu0
    %1196 = vmatprep.mubr.f32.mxu0 0.0
    %1197 = vmatmul.mubr.f32.gmra.mrb[0].mxu0 %v1035
    %v1198 = vpop.f32.mrb[0].mxu0
    %v1199 = vadd.f32 %v1056, %v1198
    %v1200 = vpop.f32.mrb[0].mxu0
    %1201 = vdwg.mxu0
    %1202 = vst [vmem:[%s3] sm:$0xff] %v1124
    %1203 = vst [vmem:[%s3 + $0x8] sm:$0xff] %v1129
    %1204 = vst [vmem:[%s3 + $0x10] sm:$0xff] %v1134
    %1205 = vst [vmem:[%s3 + $0x18] sm:$0xff] %v1139
    %1206 = vst [vmem:[%s3 + $0x20] sm:$0xff] %v1144
    %1207 = vst [vmem:[%s3 + $0x28] sm:$0xff] %v1149
    %1208 = vst [vmem:[%s3 + $0x30] sm:$0xff] %v1154
    %1209 = vst [vmem:[%s3 + $0x38] sm:$0xff] %v1159
    %1210 = vst [vmem:[%s3 + $0x40] sm:$0xff] %v1164
    %1211 = vst [vmem:[%s3 + $0x48] sm:$0xff] %v1169
    %1212 = vst [vmem:[%s3 + $0x50] sm:$0xff] %v1174
    %1213 = vst [vmem:[%s3 + $0x58] sm:$0xff] %v1179
    %1214 = vst [vmem:[%s3 + $0x60] sm:$0xff] %v1184
    %1215 = vst [vmem:[%s3 + $0x68] sm:$0xff] %v1189
    %1216 = vst [vmem:[%s3 + $0x70] sm:$0xff] %v1194
    %1217 = vst [vmem:[%s3 + $0x78] sm:$0xff] %v1199
    // Predicated region
    $region18: #{_forward.1} parent=1 // pred_check
      _
    $region19: #{_forward.1} parent=1 // pred_check_branch
      %1219 = sbr.rel (0) target = $region21
    $region20: #{_forward.1} parent=1 // pred_region
      _
    $region21: #{_forward.1} parent=1 // pred_fallthru
      _
    // Predicated region
    $region22: #{_forward.1} parent=1 // pred_check
      _
    $region23: #{_forward.1} parent=1 // pred_check_branch
      %1221 = sbr.rel (0) target = $region25
    $region24: #{_forward.1} parent=1 // pred_region
      _
    $region25: #{_forward.1} parent=1 // pred_fallthru
      _
    %1222 = vsyncpa [#allocation3], 1

</llo_original>
